<compile_context>
chip_gen: v5e
topology: v5e:2x2
jax: 0.10.0
libtpu: 0.0.40
codegen_flags: <defaults>
</compile_context>

<pallas_src>
import functools

import jax
import jax.numpy as jnp
from jax.experimental import pallas as pl
from jax.experimental.pallas import tpu as pltpu


def _mean_conv1x1_kernel(x_ref, w_ref, b_ref, o_ref, acc_ref, *, inv_hw):
    # x_ref: (1, TC, HW)   w_ref: (1, C_out, TC)   b_ref: (C_out, 1)
    # o_ref: (1, C_out, 1) acc_ref: (C_out, HW) f32 scratch
    k = pl.program_id(1)

    @pl.when(k == 0)
    def _():
        acc_ref[...] = jnp.zeros_like(acc_ref)

    x = x_ref[0]                       # (TC, HW)
    w = w_ref[0]                       # (C_out, TC), C_in chunk on lanes
    # MXU contraction over the C_in chunk; accumulate in f32.
    acc_ref[...] += jnp.dot(w, x, preferred_element_type=jnp.float32)

    @pl.when(k == pl.num_programs(1) - 1)
    def _():
        # Spatial mean (single small cross-lane reduce) + bias.
        s = jnp.sum(acc_ref[...], axis=1, keepdims=True) * inv_hw   # (C_out, 1)
        o_ref[0] = (s + b_ref[...]).astype(o_ref.dtype)


def _pick_chunk(c_in, target=288):
    """Largest multiple-of-8 divisor of c_in that is <= target (else c_in)."""
    if c_in <= target:
        return c_in
    start = (min(target, c_in) // 8) * 8
    for cand in range(start, 7, -8):
        if c_in % cand == 0:
            return cand
    return c_in


def mean_conv2d(x_nchw, weight_oihw, bias, *, chunk_target=288):
    """x_nchw: (N, C_in, H, W); weight_oihw: (C_out, C_in, 1, 1); bias: (C_out,)
    Returns (N, C_out, 1, 1), matching the PyTorch module."""
    n, c_in, h, w = x_nchw.shape
    c_out = weight_oihw.shape[0]
    hw = h * w

    tc = _pick_chunk(c_in, chunk_target)
    k_chunks = c_in // tc

    # x stays in its natural (N, C_in, HW) layout (no extra HBM transpose).
    x_flat = x_nchw.reshape(n, c_in, hw)
    # Lane-dense weight chunks: (K, C_out, TC), C_in on the lane axis.
    w_chunks = weight_oihw.reshape(c_out, k_chunks, tc).transpose(1, 0, 2)
    b_col = bias.reshape(c_out, 1)

    kernel = functools.partial(_mean_conv1x1_kernel, inv_hw=1.0 / hw)

    out = pl.pallas_call(
        kernel,
        out_shape=jax.ShapeDtypeStruct((n, c_out, 1), x_nchw.dtype),
        grid_spec=pltpu.PrefetchScalarGridSpec(
            num_scalar_prefetch=0,
            grid=(n, k_chunks),
            in_specs=[
                pl.BlockSpec((1, tc, hw), lambda i, k: (i, k, 0)),
                pl.BlockSpec((1, c_out, tc), lambda i, k: (k, 0, 0)),
                pl.BlockSpec((c_out, 1), lambda i, k: (0, 0)),
            ],
            out_specs=pl.BlockSpec((1, c_out, 1), lambda i, k: (i, 0, 0)),
            scratch_shapes=[pltpu.VMEM((c_out, hw), jnp.float32)],
        ),
        compiler_params=pltpu.CompilerParams(
            dimension_semantics=("parallel", "arbitrary")),
    )(x_flat, w_chunks, b_col)

    return out.reshape(n, c_out, 1, 1)


if __name__ == "__main__":
    # Shapes from the module: x239 = randn(1, 864, 14, 14), Conv2d(864, 36, 1)
    N, C_IN, H, W = 1, 864, 14, 14
    C_OUT = 36

    key = jax.random.PRNGKey(0)
    kx, kw, kb = jax.random.split(key, 3)

    x = jax.random.normal(kx, (N, C_IN, H, W), dtype=jnp.float32)
    # Deterministic synthetic Conv2d(864, 36, kernel_size=1) parameters.
    weight = jax.random.normal(kw, (C_OUT, C_IN, 1, 1), dtype=jnp.float32) * 0.02
    bias = jax.random.normal(kb, (C_OUT,), dtype=jnp.float32) * 0.02

    y = jax.block_until_ready(mean_conv2d(x, weight, bias))

    # Pure-JAX reference for correctness.
    mean_ref = jnp.mean(x, axis=(2, 3), keepdims=True)              # (N, C_in, 1, 1)
    ref = jnp.einsum("nchw,oc->no", mean_ref, weight.reshape(C_OUT, C_IN))
    ref = (ref + bias[None, :]).reshape(N, C_OUT, 1, 1)

    assert y.shape == (N, C_OUT, 1, 1)
    assert jnp.allclose(y, ref, atol=1e-4, rtol=1e-4), float(
        jnp.max(jnp.abs(y - ref)))
    print("KERNEL_OK")
</pallas_src>

<mosaic_0001>
module attributes {stable_mosaic.version = 11 : i64} {
  func.func @_mean_conv1x1_kernel(%arg0: i32, %arg1: i32, %arg2: memref<1x288x196xf32, #tpu.memory_space<vmem>>, %arg3: memref<1x36x288xf32, #tpu.memory_space<vmem>>, %arg4: memref<36x1xf32, #tpu.memory_space<vmem>>, %arg5: memref<1x36x1xf32, #tpu.memory_space<vmem>>, %arg6: memref<36x196xf32, #tpu.memory_space<vmem>>) attributes {dimension_semantics = [#tpu.dimension_semantics<parallel>, #tpu.dimension_semantics<arbitrary>], iteration_bounds = array<i64: 1, 3>, scalar_prefetch = 0 : i64, scratch_operands = 1 : i64, tpu.core_type = #tpu.core_type<tc>, window_params = [{transform_indices = @transform_0, window_bounds = array<i64: 1, 288, 196>}, {transform_indices = @transform_1, window_bounds = array<i64: 1, 36, 288>}, {pipeline_mode = #tpu.pipeline_mode<synchronous>, transform_indices = @transform_2, window_bounds = array<i64: 36, 1>}, {transform_indices = @transform_3, window_bounds = array<i64: 1, 36, 1>}]} {
    %c0_i32 = arith.constant 0 : i32
    %0 = arith.cmpi eq, %arg1, %c0_i32 : i32
    %1 = arith.extui %0 : i1 to i32
    %c0_i32_0 = arith.constant 0 : i32
    %2 = arith.cmpi ne, %1, %c0_i32_0 : i32
    scf.if %2 {
      %cst_11 = arith.constant 0.000000e+00 : f32
      %14 = vector.broadcast %cst_11 : f32 to vector<36x196xf32>
      %c0_12 = arith.constant 0 : index
      %c0_13 = arith.constant 0 : index
      %15 = vector.load %arg6[%c0_12, %c0_13] : memref<36x196xf32, #tpu.memory_space<vmem>>, vector<36x196xf32>
      tpu.vector_store %arg6[%c0_12, %c0_13], %14 {strides = array<i32>} : memref<36x196xf32, #tpu.memory_space<vmem>>, vector<36x196xf32>,
    } else {
    }
    %c0 = arith.constant 0 : index
    %c0_1 = arith.constant 0 : index
    %c0_2 = arith.constant 0 : index
    %3 = vector.load %arg2[%c0, %c0_1, %c0_2] : memref<1x288x196xf32, #tpu.memory_space<vmem>>, vector<1x288x196xf32>
    %4 = vector.shape_cast %3 : vector<1x288x196xf32> to vector<288x196xf32>
    %c0_3 = arith.constant 0 : index
    %c0_4 = arith.constant 0 : index
    %c0_5 = arith.constant 0 : index
    %5 = vector.load %arg3[%c0_3, %c0_4, %c0_5] : memref<1x36x288xf32, #tpu.memory_space<vmem>>, vector<1x36x288xf32>
    %6 = vector.shape_cast %5 : vector<1x36x288xf32> to vector<36x288xf32>
    %c0_6 = arith.constant 0 : index
    %c0_7 = arith.constant 0 : index
    %7 = vector.load %arg6[%c0_6, %c0_7] : memref<36x196xf32, #tpu.memory_space<vmem>>, vector<36x196xf32>
    %cst = arith.constant dense<0.000000e+00> : vector<36x196xf32>
    %8 = tpu.matmul %6, %4, %cst {dimension_numbers = #tpu.dot_dimension_numbers<[1], [0], [0], [1], [0, 0, 1, 1], [], []>} : vector<36x288xf32>, vector<288x196xf32>, vector<36x196xf32> -> vector<36x196xf32>
    %9 = arith.addf %7, %8 : vector<36x196xf32>
    %c0_8 = arith.constant 0 : index
    %c0_9 = arith.constant 0 : index
    %10 = vector.load %arg6[%c0_8, %c0_9] : memref<36x196xf32, #tpu.memory_space<vmem>>, vector<36x196xf32>
    tpu.vector_store %arg6[%c0_8, %c0_9], %9 {strides = array<i32>} : memref<36x196xf32, #tpu.memory_space<vmem>>, vector<36x196xf32>,
    %c2_i32 = arith.constant 2 : i32
    %11 = arith.cmpi eq, %arg1, %c2_i32 : i32
    %12 = arith.extui %11 : i1 to i32
    %c0_i32_10 = arith.constant 0 : i32
    %13 = arith.cmpi ne, %12, %c0_i32_10 : i32
    scf.if %13 {
      %c0_11 = arith.constant 0 : index
      %c0_12 = arith.constant 0 : index
      %14 = vector.load %arg6[%c0_11, %c0_12] : memref<36x196xf32, #tpu.memory_space<vmem>>, vector<36x196xf32>
      %cst_13 = arith.constant dense<0.000000e+00> : vector<36xf32>
      %15 = vector.multi_reduction <add>, %14, %cst_13 [1] : vector<36x196xf32> to vector<36xf32>
      %16 = vector.shape_cast %15 : vector<36xf32> to vector<36x1xf32>
      %cst_14 = arith.constant 0.00510204071 : f32
      %17 = vector.broadcast %cst_14 : f32 to vector<36x1xf32>
      %18 = arith.mulf %16, %17 : vector<36x1xf32>
      %c0_15 = arith.constant 0 : index
      %c0_16 = arith.constant 0 : index
      %19 = vector.load %arg4[%c0_15, %c0_16] : memref<36x1xf32, #tpu.memory_space<vmem>>, vector<36x1xf32>
      %20 = arith.addf %18, %19 : vector<36x1xf32>
      %c0_17 = arith.constant 0 : index
      %c0_18 = arith.constant 0 : index
      %c0_19 = arith.constant 0 : index
      %21 = vector.load %arg5[%c0_17, %c0_18, %c0_19] : memref<1x36x1xf32, #tpu.memory_space<vmem>>, vector<1x36x1xf32>
      %22 = vector.shape_cast %21 : vector<1x36x1xf32> to vector<36x1xf32>
      %23 = vector.shape_cast %20 : vector<36x1xf32> to vector<1x36x1xf32>
      tpu.vector_store %arg5[%c0_17, %c0_18, %c0_19], %23 {strides = array<i32>} : memref<1x36x1xf32, #tpu.memory_space<vmem>>, vector<1x36x1xf32>,
    } else {
    }
    return
  }
  func.func @transform_0(%arg0: i32, %arg1: i32) -> (i32, i32, i32) {
    %c0_i32 = arith.constant 0 : i32
    %c0_i32_0 = arith.constant 0 : i32
    return %arg0, %arg1, %c0_i32 : i32, i32, i32
  }
  func.func @transform_1(%arg0: i32, %arg1: i32) -> (i32, i32, i32) {
    %c0_i32 = arith.constant 0 : i32
    %c0_i32_0 = arith.constant 0 : i32
    %c0_i32_1 = arith.constant 0 : i32
    return %arg1, %c0_i32, %c0_i32_0 : i32, i32, i32
  }
  func.func @transform_2(%arg0: i32, %arg1: i32) -> (i32, i32) {
    %c0_i32 = arith.constant 0 : i32
    %c0_i32_0 = arith.constant 0 : i32
    %c0_i32_1 = arith.constant 0 : i32
    return %c0_i32, %c0_i32_0 : i32, i32
  }
  func.func @transform_3(%arg0: i32, %arg1: i32) -> (i32, i32, i32) {
    %c0_i32 = arith.constant 0 : i32
    %c0_i32_0 = arith.constant 0 : i32
    %c0_i32_1 = arith.constant 0 : i32
    return %arg0, %c0_i32, %c0_i32_0 : i32, i32, i32
  }
}

</mosaic_0001>

<llo_original>
// kernel: tpu_custom_call.1
$region0: #{tpu_custom_call.1}
  #allocation0 [shape = 'u32[]', space=smem, size = 0x4, offset = 0x4, fixed_abs, tag = 'smem constant byte address 0x4 - core index']
  #allocation1 [shape = 'u32[72,128]{1,0:T(1,128)}', space=vmem, size = 0x9000, scoped, tag = 'internal scratch']
  #allocation2 [shape = 'f32[36,196]{1,0:T(8,128)}', space=vmem, size = 0xa000, scoped, tag = 'scratch operand']
  %s0 = inlined_call_operand.vmem [shape: f32[1,864,196], index: 0, kind: input, shape index: {}]
  %s1 = inlined_call_operand.vmem [shape: f32[3,36,288], index: 1, kind: input, shape index: {}]
  %s2 = inlined_call_operand.vmem [shape: f32[36,1], index: 2, kind: input, shape index: {}]
  %s3 = inlined_call_operand.vmem [shape: f32[1,36,1], index: 3, kind: output, shape index: {}]
  %s4 = sld [smem:[#allocation0]]
  $region53: #{tpu_custom_call.1} parent=0
    _
  %s6 = ssub.s32 1, %s4
  %s7 = scalar_select 0, %s6, %s4
  loop: start=0, step=1, limit=5
  $region2: #{tpu_custom_call.1} parent=0 // loop_pre_header
    _
  $region3: #{tpu_custom_call.1} parent=0 // loop_header
    %s9 = sphi 0, %s13
    %p10 = scmp.ge.s32.totalorder %s9, 5
    %s16 = sphi 0, %s28
    %s17 = sphi 0, %s24
    %s18 = sphi 0, %s16
    %s19 = sphi 0, %s17
    %s20 = sphi 0, %s18
    %s21 = sphi 0, %s19
    %s33 = sphi 0, %s35
    %s36 = sphi 0, %s33
    %s37 = sphi 0, %s36
    %s53 = sphi 0, %s37
    %s59 = sphi 0, %s61
    %s62 = sphi 0, %s59
    %s63 = sphi 0, %s62
    %s79 = sphi 0, %s63
    %s83 = sphi 0, %s83
    %s85 = sphi 0, %s83
    %s86 = sphi 0, %s85
    %s100 = sphi 0, %s86
    %s106 = sphi 0, %s108
    %s109 = sphi 0, %s106
    %s110 = sphi 0, %s109
    %s126 = sphi 0, %s110
  $region4: #{tpu_custom_call.1} parent=0 // loop_header_branch
    %12 = sbr.rel (%p10) target = $region8
  $region5: #{tpu_custom_call.1} parent=0 // loop_body
    %s14 = ssub.s32 %s9, 1
    %s15 = ssub.s32 %s9, 2
    %s22 = sadd.s32 1, %s17
    %p23 = scmp.ge.s32.totalorder %s22, 3
    %s24 = scalar_select %p23, 0, %s22
    %s25 = sadd.s32 1, %s16
    %s26 = scalar_select %p23, %s25, %s16
    %p27 = scmp.ge.s32.totalorder %s26, 1
    %s28 = scalar_select %p27, 0, %s26
    %s29 = ssub.s32 %s16, %s28
    %s30 = ssub.s32 %s17, %s24
    %s31 = sor.u32 %s29, %s30
    %p32 = scmp.eq.s32.totalorder %s31, 0
    %s34 = sadd.s32 %s33, 1
    %s35 = scalar_select %p32, %s33, %s34
    %p38 = pneg %p32
    %p39 = scmp.eq.s32.totalorder %s9, 2
    %p40 = por %p38, %p39
    %p41 = scmp.ne.s32.totalorder %s33, %s36
    %p42 = scmp.eq.s32.totalorder %s9, 0
    %p43 = por %p41, %p42
    %p44 = scmp.ne.s32.totalorder %s33, %s36
    %p45 = scmp.eq.s32.totalorder %s14, 2
    %p46 = por %p44, %p45
    %p47 = scmp.ne.s32.totalorder %s36, %s37
    %p48 = scmp.eq.s32.totalorder %s14, 0
    %p49 = por %p47, %p48
    %p50 = scmp.ne.s32.totalorder %s36, %s37
    %p51 = scmp.eq.s32.totalorder %s15, 2
    %p52 = por %p50, %p51
    %p54 = scmp.ne.s32.totalorder %s37, %s53
    %p55 = scmp.eq.s32.totalorder %s15, 0
    %p56 = por %p54, %p55
    %s57 = ssub.s32 %s17, %s24
    %p58 = scmp.eq.s32.totalorder %s57, 0
    %s60 = sadd.s32 %s59, 1
    %s61 = scalar_select %p58, %s59, %s60
    %p64 = pneg %p58
    %p65 = scmp.eq.s32.totalorder %s9, 2
    %p66 = por %p64, %p65
    %p67 = scmp.ne.s32.totalorder %s59, %s62
    %p68 = scmp.eq.s32.totalorder %s9, 0
    %p69 = por %p67, %p68
    %p70 = scmp.ne.s32.totalorder %s59, %s62
    %p71 = scmp.eq.s32.totalorder %s14, 2
    %p72 = por %p70, %p71
    %p73 = scmp.ne.s32.totalorder %s62, %s63
    %p74 = scmp.eq.s32.totalorder %s14, 0
    %p75 = por %p73, %p74
    %p76 = scmp.ne.s32.totalorder %s62, %s63
    %p77 = scmp.eq.s32.totalorder %s15, 2
    %p78 = por %p76, %p77
    %p80 = scmp.ne.s32.totalorder %s63, %s79
    %p81 = scmp.eq.s32.totalorder %s15, 0
    %p82 = por %p80, %p81
    %s84 = sadd.s32 %s83, 1
    %p87 = scmp.eq.s32.totalorder %s9, 2
    %p88 = scmp.ne.s32.totalorder %s83, %s85
    %p89 = scmp.eq.s32.totalorder %s9, 0
    %p90 = por %p88, %p89
    %p91 = scmp.ne.s32.totalorder %s83, %s85
    %p92 = scmp.eq.s32.totalorder %s14, 2
    %p93 = por %p91, %p92
    %p94 = scmp.ne.s32.totalorder %s85, %s86
    %p95 = scmp.eq.s32.totalorder %s14, 0
    %p96 = por %p94, %p95
    %p97 = scmp.ne.s32.totalorder %s85, %s86
    %p98 = scmp.eq.s32.totalorder %s15, 2
    %p99 = por %p97, %p98
    %p101 = scmp.ne.s32.totalorder %s86, %s100
    %p102 = scmp.eq.s32.totalorder %s15, 0
    %p103 = por %p101, %p102
    %s104 = ssub.s32 %s16, %s28
    %p105 = scmp.eq.s32.totalorder %s104, 0
    %s107 = sadd.s32 %s106, 1
    %s108 = scalar_select %p105, %s106, %s107
    %p111 = pneg %p105
    %p112 = scmp.eq.s32.totalorder %s9, 2
    %p113 = por %p111, %p112
    %p114 = scmp.ne.s32.totalorder %s106, %s109
    %p115 = scmp.eq.s32.totalorder %s9, 0
    %p116 = por %p114, %p115
    %p117 = scmp.ne.s32.totalorder %s106, %s109
    %p118 = scmp.eq.s32.totalorder %s14, 2
    %p119 = por %p117, %p118
    %p120 = scmp.ne.s32.totalorder %s109, %s110
    %p121 = scmp.eq.s32.totalorder %s14, 0
    %p122 = por %p120, %p121
    %p123 = scmp.ne.s32.totalorder %s109, %s110
    %p124 = scmp.eq.s32.totalorder %s15, 2
    %p125 = por %p123, %p124
    %p127 = scmp.ne.s32.totalorder %s110, %s126
    %p128 = scmp.eq.s32.totalorder %s15, 0
    %p129 = por %p127, %p128
    %p130 = scmp.le.s32.totalorder 1, %s9
    %p131 = scmp.lt.s32.totalorder %s9, 4
    %p132 = pnand %p130, %p131
    %p133 = pneg %p132
    // Predicated region
    $region9: #{tpu_custom_call.1} parent=5 // pred_check
      _
    $region10: #{tpu_custom_call.1} parent=5 // pred_check_branch
      %135 = sbr.rel (%p132) target = $region12
    $region11: #{tpu_custom_call.1} parent=5 // pred_region
      %s136 = ssub.s32 %s9, 1
      // Predicated region
      $region13: #{tpu_custom_call.1} parent=11 // pred_check
        %p137 = pneg %p96
      $region14: #{tpu_custom_call.1} parent=11 // pred_check_branch
        %139 = sbr.rel (%p137) target = $region16
      $region15: #{tpu_custom_call.1} parent=11 // pred_region
        _
      $region16: #{tpu_custom_call.1} parent=11 // pred_fallthru
        _
    $region12: #{tpu_custom_call.1} parent=5 // pred_fallthru
      _
    %p140 = scmp.lt.s32.totalorder %s9, 3
    // Predicated region
    $region17: #{tpu_custom_call.1} parent=5 // pred_check
      %p141 = pneg %p140
    $region18: #{tpu_custom_call.1} parent=5 // pred_check_branch
      %143 = sbr.rel (%p141) target = $region20
    $region19: #{tpu_custom_call.1} parent=5 // pred_region
      // Predicated region
      $region21: #{tpu_custom_call.1} parent=19 // pred_check
        %p144 = pneg %p43
      $region22: #{tpu_custom_call.1} parent=19 // pred_check_branch
        %146 = sbr.rel (%p144) target = $region24
      $region23: #{tpu_custom_call.1} parent=19 // pred_region
        %s147 = smul.u32 36, %s17
        %p148 = scmp.lt.s32.totalorder %s16, 0
        %s149 = scalar_select %p148, %s16, 0
        %p150 = scmp.lt.s32.totalorder %s147, 107
        %s151 = scalar_select %p150, %s147, 107
        %s152 = smul.addr %s151, 2
        %s153 = smul.addr %s149, 216
        %s154 = sadd.s32 %s152, %s153
        %s155 = smul.addr %s154, 8
        %s156 = scalar_lea.vmem %s0, %s155
        %s157 = smul.u32 36, %s17
      $region24: #{tpu_custom_call.1} parent=19 // pred_fallthru
        _
      // Predicated region
      $region25: #{tpu_custom_call.1} parent=19 // pred_check
        %p158 = pneg %p69
      $region26: #{tpu_custom_call.1} parent=19 // pred_check_branch
        %160 = sbr.rel (%p158) target = $region28
      $region27: #{tpu_custom_call.1} parent=19 // pred_region
        %p161 = scmp.lt.s32.totalorder %s17, 2
        %s162 = scalar_select %p161, %s17, 2
        %s163 = smul.addr %s162, 15
        %s164 = smul.addr %s163, 8
        %s165 = scalar_lea.vmem %s1, %s164
      $region28: #{tpu_custom_call.1} parent=19 // pred_fallthru
        _
    $region20: #{tpu_custom_call.1} parent=5 // pred_fallthru
      _
    %p166 = scmp.le.s32.totalorder 1, %s9
    %p167 = scmp.lt.s32.totalorder %s9, 4
    %p168 = pnand %p166, %p167
    %p169 = pneg %p168
    // Predicated region
    $region29: #{tpu_custom_call.1} parent=5 // pred_check
      _
    $region30: #{tpu_custom_call.1} parent=5 // pred_check_branch
      %171 = sbr.rel (%p168) target = $region32
    $region31: #{tpu_custom_call.1} parent=5 // pred_region
      %s172 = ssub.s32 %s9, 1
      %s173 = smul.u32 36, %s19
      %p174 = scmp.lt.s32.totalorder %s18, 0
      %s175 = scalar_select %p174, %s18, 0
      %p176 = scmp.lt.s32.totalorder %s173, 107
      %s177 = scalar_select %p176, %s173, 107
      %s178 = smul.addr %s177, 2
      %s179 = smul.addr %s175, 216
      %s180 = sadd.s32 %s178, %s179
      %s181 = smul.addr %s180, 8
      %s182 = scalar_lea.vmem %s0, %s181
      %p183 = pneg %p49
      %p184 = pneg %p46
      %p185 = scmp.lt.s32.totalorder %s19, 2
      %s186 = scalar_select %p185, %s19, 2
      %s187 = smul.addr %s186, 15
      %s188 = smul.addr %s187, 8
      %s189 = scalar_lea.vmem %s1, %s188
      %p190 = pneg %p75
      %p191 = pneg %p72
      %p192 = pneg %p96
      %p193 = pneg %p93
      %p194 = pneg %p122
      %p195 = pneg %p119
      %p196 = scmp.lt.s32.totalorder %s18, 0
      %s197 = scalar_select %p196, %s18, 0
      %s198 = smul.addr %s197, 5
      %s199 = smul.addr %s198, 8
      %s200 = scalar_lea.vmem %s3, %s199
      %s201 = smul.u32 36, %s19
      %p202 = scmp.lt.s32.totalorder %s18, 0
      %s203 = scalar_select %p202, %s18, 0
      %p204 = scmp.lt.s32.totalorder %s201, 107
      %s205 = scalar_select %p204, %s201, 107
      %s206 = smul.addr %s205, 2
      %s207 = smul.addr %s203, 216
      %s208 = sadd.s32 %s206, %s207
      %s209 = smul.addr %s208, 8
      %s210 = scalar_lea.vmem %s0, %s209
      %s211 = smul.u32 36, %s19
      %p212 = scmp.lt.s32.totalorder %s19, 2
      %s213 = scalar_select %p212, %s19, 2
      %s214 = smul.addr %s213, 15
      %s215 = smul.addr %s214, 8
      %s216 = scalar_lea.vmem %s1, %s215
      %p217 = scmp.lt.s32.totalorder %s18, 0
      %s218 = scalar_select %p217, %s18, 0
      %s219 = smul.addr %s218, 5
      %s220 = smul.addr %s219, 8
      %s221 = scalar_lea.vmem %s3, %s220
      %p222 = scmp.eq.s32.totalorder %s19, 0
      // Predicated region
      $region33: #{tpu_custom_call.1} parent=31 // pred_check
        %p223 = pneg %p222
      $region34: #{tpu_custom_call.1} parent=31 // pred_check_branch
        %225 = sbr.rel (%p223) target = $region36
      $region35: #{tpu_custom_call.1} parent=31 // pred_region
        %226 = vst [vmem:[#allocation2] sm:$0xff] 0.0
        %vm227 = vcmask 556032
        %228 = vst.msk [vmem:[#allocation2 + $0x8] sm:$0xff] %vm227, 0.0
        %229 = vst [vmem:[#allocation2 + $0x10] sm:$0xff] 0.0
        %230 = vst.msk [vmem:[#allocation2 + $0x18] sm:$0xff] %vm227, 0.0
        %231 = vst [vmem:[#allocation2 + $0x20] sm:$0xff] 0.0
        %232 = vst.msk [vmem:[#allocation2 + $0x28] sm:$0xff] %vm227, 0.0
        %233 = vst [vmem:[#allocation2 + $0x30] sm:$0xff] 0.0
        %234 = vst.msk [vmem:[#allocation2 + $0x38] sm:$0xff] %vm227, 0.0
        %235 = vst [vmem:[#allocation2 + $0x40] sm:$0xf] 0.0
        %vm236 = vcmask 551936
        %237 = vst.msk [vmem:[#allocation2 + $0x48] sm:$0xf] %vm236, 0.0
      $region36: #{tpu_custom_call.1} parent=31 // pred_fallthru
        _
      %v238 = vld [vmem:[%s210] sm:$0xff]
      %v239 = vld [vmem:[%s210 + $0x8] sm:$0xff]
      %v240 = vld [vmem:[%s210 + $0x10] sm:$0xff]
      %v241 = vld [vmem:[%s210 + $0x18] sm:$0xff]
      %v242 = vld [vmem:[%s210 + $0x20] sm:$0xff]
      %v243 = vld [vmem:[%s210 + $0x28] sm:$0xff]
      %v244 = vld [vmem:[%s210 + $0x30] sm:$0xff]
      %v245 = vld [vmem:[%s210 + $0x38] sm:$0xff]
      %v246 = vld [vmem:[%s210 + $0x40] sm:$0xff]
      %v247 = vld [vmem:[%s210 + $0x48] sm:$0xff]
      %v248 = vld [vmem:[%s210 + $0x50] sm:$0xff]
      %v249 = vld [vmem:[%s210 + $0x58] sm:$0xff]
      %v250 = vld [vmem:[%s210 + $0x60] sm:$0xff]
      %v251 = vld [vmem:[%s210 + $0x68] sm:$0xff]
      %v252 = vld [vmem:[%s210 + $0x70] sm:$0xff]
      %v253 = vld [vmem:[%s210 + $0x78] sm:$0xff]
      %v254 = vld [vmem:[%s210 + $0x80] sm:$0xff]
      %v255 = vld [vmem:[%s210 + $0x88] sm:$0xff]
      %v256 = vld [vmem:[%s210 + $0x90] sm:$0xff]
      %v257 = vld [vmem:[%s210 + $0x98] sm:$0xff]
      %v258 = vld [vmem:[%s210 + $0xa0] sm:$0xff]
      %v259 = vld [vmem:[%s210 + $0xa8] sm:$0xff]
      %v260 = vld [vmem:[%s210 + $0xb0] sm:$0xff]
      %v261 = vld [vmem:[%s210 + $0xb8] sm:$0xff]
      %v262 = vld [vmem:[%s210 + $0xc0] sm:$0xff]
      %v263 = vld [vmem:[%s210 + $0xc8] sm:$0xff]
      %v264 = vld [vmem:[%s210 + $0xd0] sm:$0xff]
      %v265 = vld [vmem:[%s210 + $0xd8] sm:$0xff]
      %v266 = vld [vmem:[%s210 + $0xe0] sm:$0xff]
      %v267 = vld [vmem:[%s210 + $0xe8] sm:$0xff]
      %v268 = vld [vmem:[%s210 + $0xf0] sm:$0xff]
      %v269 = vld [vmem:[%s210 + $0xf8] sm:$0xff]
      %v270 = vld [vmem:[%s210 + $0x100] sm:$0xff]
      %v271 = vld [vmem:[%s210 + $0x108] sm:$0xff]
      %v272 = vld [vmem:[%s210 + $0x110] sm:$0xff]
      %v273 = vld [vmem:[%s210 + $0x118] sm:$0xff]
      %v274 = vld [vmem:[%s210 + $0x120] sm:$0xff]
      %v275 = vld [vmem:[%s210 + $0x128] sm:$0xff]
      %v276 = vld [vmem:[%s210 + $0x130] sm:$0xff]
      %v277 = vld [vmem:[%s210 + $0x138] sm:$0xff]
      %v278 = vld [vmem:[%s210 + $0x140] sm:$0xff]
      %v279 = vld [vmem:[%s210 + $0x148] sm:$0xff]
      %v280 = vld [vmem:[%s210 + $0x150] sm:$0xff]
      %v281 = vld [vmem:[%s210 + $0x158] sm:$0xff]
      %v282 = vld [vmem:[%s210 + $0x160] sm:$0xff]
      %v283 = vld [vmem:[%s210 + $0x168] sm:$0xff]
      %v284 = vld [vmem:[%s210 + $0x170] sm:$0xff]
      %v285 = vld [vmem:[%s210 + $0x178] sm:$0xff]
      %v286 = vld [vmem:[%s210 + $0x180] sm:$0xff]
      %v287 = vld [vmem:[%s210 + $0x188] sm:$0xff]
      %v288 = vld [vmem:[%s210 + $0x190] sm:$0xff]
      %v289 = vld [vmem:[%s210 + $0x198] sm:$0xff]
      %v290 = vld [vmem:[%s210 + $0x1a0] sm:$0xff]
      %v291 = vld [vmem:[%s210 + $0x1a8] sm:$0xff]
      %v292 = vld [vmem:[%s210 + $0x1b0] sm:$0xff]
      %v293 = vld [vmem:[%s210 + $0x1b8] sm:$0xff]
      %v294 = vld [vmem:[%s210 + $0x1c0] sm:$0xff]
      %v295 = vld [vmem:[%s210 + $0x1c8] sm:$0xff]
      %v296 = vld [vmem:[%s210 + $0x1d0] sm:$0xff]
      %v297 = vld [vmem:[%s210 + $0x1d8] sm:$0xff]
      %v298 = vld [vmem:[%s210 + $0x1e0] sm:$0xff]
      %v299 = vld [vmem:[%s210 + $0x1e8] sm:$0xff]
      %v300 = vld [vmem:[%s210 + $0x1f0] sm:$0xff]
      %v301 = vld [vmem:[%s210 + $0x1f8] sm:$0xff]
      %v302 = vld [vmem:[%s210 + $0x200] sm:$0xff]
      %v303 = vld [vmem:[%s210 + $0x208] sm:$0xff]
      %v304 = vld [vmem:[%s210 + $0x210] sm:$0xff]
      %v305 = vld [vmem:[%s210 + $0x218] sm:$0xff]
      %v306 = vld [vmem:[%s210 + $0x220] sm:$0xff]
      %v307 = vld [vmem:[%s210 + $0x228] sm:$0xff]
      %v308 = vld [vmem:[%s210 + $0x230] sm:$0xff]
      %v309 = vld [vmem:[%s210 + $0x238] sm:$0xff]
      %v310 = vld [vmem:[%s216] sm:$0xff]
      %v311 = vld [vmem:[%s216 + $0x8] sm:$0xff]
      %v312 = vld [vmem:[%s216 + $0x10] sm:$0xff]
      %v313 = vld [vmem:[%s216 + $0x18] sm:$0xff]
      %v314 = vld [vmem:[%s216 + $0x20] sm:$0xff]
      %v315 = vld [vmem:[%s216 + $0x28] sm:$0xff]
      %v316 = vld [vmem:[%s216 + $0x30] sm:$0xff]
      %v317 = vld [vmem:[%s216 + $0x38] sm:$0xff]
      %v318 = vld [vmem:[%s216 + $0x40] sm:$0xff]
      %v319 = vld [vmem:[%s216 + $0x48] sm:$0xff]
      %v320 = vld [vmem:[%s216 + $0x50] sm:$0xff]
      %v321 = vld [vmem:[%s216 + $0x58] sm:$0xff]
      %v322 = vld [vmem:[%s216 + $0x60] sm:$0xf]
      %v323 = vld [vmem:[%s216 + $0x68] sm:$0xf]
      %v324 = vld [vmem:[%s216 + $0x70] sm:$0xf]
      %v325 = vld [vmem:[#allocation2] sm:$0xff]
      %v326 = vld [vmem:[#allocation2 + $0x8] sm:$0xff]
      %v327 = vld [vmem:[#allocation2 + $0x10] sm:$0xff]
      %v328 = vld [vmem:[#allocation2 + $0x18] sm:$0xff]
      %v329 = vld [vmem:[#allocation2 + $0x20] sm:$0xff]
      %v330 = vld [vmem:[#allocation2 + $0x28] sm:$0xff]
      %v331 = vld [vmem:[#allocation2 + $0x30] sm:$0xff]
      %v332 = vld [vmem:[#allocation2 + $0x38] sm:$0xff]
      %v333 = vld [vmem:[#allocation2 + $0x40] sm:$0xf]
      %v334 = vld [vmem:[#allocation2 + $0x48] sm:$0xf]
      %vm335 = vcmask 261120
      %v337 = vsel %vm335, %v312, 0
      %v340 = vsel %vm335, %v315, 0
      %v343 = vsel %vm335, %v318, 0
      %v346 = vsel %vm335, %v321, 0
      %v349 = vsel %vm335, %v324, 0
      %351 = vmatpush.msra.mxu0 %v268
      %352 = vmatpush.msra.mxu0 %v266
      %353 = vmatpush.msra.mxu0 %v264
      %354 = vmatpush.msra.mxu0 %v262
      %355 = vmatpush.msra.mxu0 %v260
      %356 = vmatpush.msra.mxu0 %v258
      %357 = vmatpush.msra.mxu0 %v256
      %358 = vmatpush.msra.mxu0 %v254
      %359 = vmatpush.msra.mxu0 %v252
      %360 = vmatpush.msra.mxu0 %v250
      %361 = vmatpush.msra.mxu0 %v248
      %362 = vmatpush.msra.mxu0 %v246
      %363 = vmatpush.msra.mxu0 %v244
      %364 = vmatpush.msra.mxu0 %v242
      %365 = vmatpush.msra.mxu0 %v240
      %366 = vmatpush.msra.mxu0 %v238
      %367 = vmatmul.f32.gmra.mxu0 %v310
      %v368 = vpop.f32.mrf.mxu0
      %v369 = vadd.f32 0.0, %v368
      %370 = vmatmul.f32.gmra.mxu0 %v313
      %v371 = vpop.f32.mrf.mxu0
      %v372 = vadd.f32 0.0, %v371
      %373 = vmatmul.f32.gmra.mxu0 %v316
      %v374 = vpop.f32.mrf.mxu0
      %v375 = vadd.f32 0.0, %v374
      %376 = vmatmul.f32.gmra.mxu0 %v319
      %v377 = vpop.f32.mrf.mxu0
      %v378 = vadd.f32 0.0, %v377
      %379 = vmatmul.f32.gmra.mxu0 %v322
      %v380 = vpop.f32.mrf.mxu0
      %v381 = vadd.f32 0.0, %v380
      %382 = vdwg.mxu0
      %383 = vmatpush.msra.mxu0 %v300
      %384 = vmatpush.msra.mxu0 %v298
      %385 = vmatpush.msra.mxu0 %v296
      %386 = vmatpush.msra.mxu0 %v294
      %387 = vmatpush.msra.mxu0 %v292
      %388 = vmatpush.msra.mxu0 %v290
      %389 = vmatpush.msra.mxu0 %v288
      %390 = vmatpush.msra.mxu0 %v286
      %391 = vmatpush.msra.mxu0 %v284
      %392 = vmatpush.msra.mxu0 %v282
      %393 = vmatpush.msra.mxu0 %v280
      %394 = vmatpush.msra.mxu0 %v278
      %395 = vmatpush.msra.mxu0 %v276
      %396 = vmatpush.msra.mxu0 %v274
      %397 = vmatpush.msra.mxu0 %v272
      %398 = vmatpush.msra.mxu0 %v270
      %399 = vmatmul.f32.gmra.mxu0 %v311
      %v400 = vpop.f32.mrf.mxu0
      %v401 = vadd.f32 %v369, %v400
      %402 = vmatmul.f32.gmra.mxu0 %v314
      %v403 = vpop.f32.mrf.mxu0
      %v404 = vadd.f32 %v372, %v403
      %405 = vmatmul.f32.gmra.mxu0 %v317
      %v406 = vpop.f32.mrf.mxu0
      %v407 = vadd.f32 %v375, %v406
      %408 = vmatmul.f32.gmra.mxu0 %v320
      %v409 = vpop.f32.mrf.mxu0
      %v410 = vadd.f32 %v378, %v409
      %411 = vmatmul.f32.gmra.mxu0 %v323
      %v412 = vpop.f32.mrf.mxu0
      %v413 = vadd.f32 %v381, %v412
      %414 = vdwg.mxu0
      %415 = vmatpush.msra.mxu0 0.0
      %416 = vmatpush.msra.mxu0 0.0
      %417 = vmatpush.msra.mxu0 0.0
      %418 = vmatpush.msra.mxu0 0.0
      %419 = vmatpush.msra.mxu0 0.0
      %420 = vmatpush.msra.mxu0 0.0
      %421 = vmatpush.msra.mxu0 0.0
      %422 = vmatpush.msra.mxu0 0.0
      %423 = vmatpush.msra.mxu0 0.0
      %424 = vmatpush.msra.mxu0 0.0
      %425 = vmatpush.msra.mxu0 0.0
      %426 = vmatpush.msra.mxu0 0.0
      %427 = vmatpush.msra.mxu0 %v308
      %428 = vmatpush.msra.mxu0 %v306
      %429 = vmatpush.msra.mxu0 %v304
      %430 = vmatpush.msra.mxu0 %v302
      %431 = vmatmul.f32.gmra.mxu0 %v337
      %v432 = vpop.f32.mrf.mxu0
      %v433 = vadd.f32 %v401, %v432
      %434 = vmatmul.f32.gmra.mxu0 %v340
      %v435 = vpop.f32.mrf.mxu0
      %v436 = vadd.f32 %v404, %v435
      %437 = vmatmul.f32.gmra.mxu0 %v343
      %v438 = vpop.f32.mrf.mxu0
      %v439 = vadd.f32 %v407, %v438
      %440 = vmatmul.f32.gmra.mxu0 %v346
      %v441 = vpop.f32.mrf.mxu0
      %v442 = vadd.f32 %v410, %v441
      %443 = vmatmul.f32.gmra.mxu0 %v349
      %v444 = vpop.f32.mrf.mxu0
      %v445 = vadd.f32 %v413, %v444
      %446 = vdwg.mxu0
      %447 = vmatpush.msra.mxu0 %v269
      %448 = vmatpush.msra.mxu0 %v267
      %449 = vmatpush.msra.mxu0 %v265
      %450 = vmatpush.msra.mxu0 %v263
      %451 = vmatpush.msra.mxu0 %v261
      %452 = vmatpush.msra.mxu0 %v259
      %453 = vmatpush.msra.mxu0 %v257
      %454 = vmatpush.msra.mxu0 %v255
      %455 = vmatpush.msra.mxu0 %v253
      %456 = vmatpush.msra.mxu0 %v251
      %457 = vmatpush.msra.mxu0 %v249
      %458 = vmatpush.msra.mxu0 %v247
      %459 = vmatpush.msra.mxu0 %v245
      %460 = vmatpush.msra.mxu0 %v243
      %461 = vmatpush.msra.mxu0 %v241
      %462 = vmatpush.msra.mxu0 %v239
      %463 = vmatmul.f32.gmra.mxu0 %v310
      %v464 = vpop.f32.mrf.mxu0
      %v465 = vadd.f32 0.0, %v464
      %466 = vmatmul.f32.gmra.mxu0 %v313
      %v467 = vpop.f32.mrf.mxu0
      %v468 = vadd.f32 0.0, %v467
      %469 = vmatmul.f32.gmra.mxu0 %v316
      %v470 = vpop.f32.mrf.mxu0
      %v471 = vadd.f32 0.0, %v470
      %472 = vmatmul.f32.gmra.mxu0 %v319
      %v473 = vpop.f32.mrf.mxu0
      %v474 = vadd.f32 0.0, %v473
      %475 = vmatmul.f32.gmra.mxu0 %v322
      %v476 = vpop.f32.mrf.mxu0
      %v477 = vadd.f32 0.0, %v476
      %478 = vdwg.mxu0
      %479 = vmatpush.msra.mxu0 %v301
      %480 = vmatpush.msra.mxu0 %v299
      %481 = vmatpush.msra.mxu0 %v297
      %482 = vmatpush.msra.mxu0 %v295
      %483 = vmatpush.msra.mxu0 %v293
      %484 = vmatpush.msra.mxu0 %v291
      %485 = vmatpush.msra.mxu0 %v289
      %486 = vmatpush.msra.mxu0 %v287
      %487 = vmatpush.msra.mxu0 %v285
      %488 = vmatpush.msra.mxu0 %v283
      %489 = vmatpush.msra.mxu0 %v281
      %490 = vmatpush.msra.mxu0 %v279
      %491 = vmatpush.msra.mxu0 %v277
      %492 = vmatpush.msra.mxu0 %v275
      %493 = vmatpush.msra.mxu0 %v273
      %494 = vmatpush.msra.mxu0 %v271
      %495 = vmatmul.f32.gmra.mxu0 %v311
      %v496 = vpop.f32.mrf.mxu0
      %v497 = vadd.f32 %v465, %v496
      %498 = vmatmul.f32.gmra.mxu0 %v314
      %v499 = vpop.f32.mrf.mxu0
      %v500 = vadd.f32 %v468, %v499
      %501 = vmatmul.f32.gmra.mxu0 %v317
      %v502 = vpop.f32.mrf.mxu0
      %v503 = vadd.f32 %v471, %v502
      %504 = vmatmul.f32.gmra.mxu0 %v320
      %v505 = vpop.f32.mrf.mxu0
      %v506 = vadd.f32 %v474, %v505
      %507 = vmatmul.f32.gmra.mxu0 %v323
      %v508 = vpop.f32.mrf.mxu0
      %v509 = vadd.f32 %v477, %v508
      %510 = vdwg.mxu0
      %511 = vmatpush.msra.mxu0 0.0
      %512 = vmatpush.msra.mxu0 0.0
      %513 = vmatpush.msra.mxu0 0.0
      %514 = vmatpush.msra.mxu0 0.0
      %515 = vmatpush.msra.mxu0 0.0
      %516 = vmatpush.msra.mxu0 0.0
      %517 = vmatpush.msra.mxu0 0.0
      %518 = vmatpush.msra.mxu0 0.0
      %519 = vmatpush.msra.mxu0 0.0
      %520 = vmatpush.msra.mxu0 0.0
      %521 = vmatpush.msra.mxu0 0.0
      %522 = vmatpush.msra.mxu0 0.0
      %523 = vmatpush.msra.mxu0 %v309
      %524 = vmatpush.msra.mxu0 %v307
      %525 = vmatpush.msra.mxu0 %v305
      %526 = vmatpush.msra.mxu0 %v303
      %527 = vmatmul.f32.gmra.mxu0 %v337
      %v528 = vpop.f32.mrf.mxu0
      %v529 = vadd.f32 %v497, %v528
      %530 = vmatmul.f32.gmra.mxu0 %v340
      %v531 = vpop.f32.mrf.mxu0
      %v532 = vadd.f32 %v500, %v531
      %533 = vmatmul.f32.gmra.mxu0 %v343
      %v534 = vpop.f32.mrf.mxu0
      %v535 = vadd.f32 %v503, %v534
      %536 = vmatmul.f32.gmra.mxu0 %v346
      %v537 = vpop.f32.mrf.mxu0
      %v538 = vadd.f32 %v506, %v537
      %539 = vmatmul.f32.gmra.mxu0 %v349
      %v540 = vpop.f32.mrf.mxu0
      %v541 = vadd.f32 %v509, %v540
      %542 = vdwg.mxu0
      %v543 = vadd.f32 %v325, %v433
      %v544 = vadd.f32 %v326, %v529
      %v545 = vadd.f32 %v327, %v436
      %v546 = vadd.f32 %v328, %v532
      %v547 = vadd.f32 %v329, %v439
      %v548 = vadd.f32 %v330, %v535
      %v549 = vadd.f32 %v331, %v442
      %v550 = vadd.f32 %v332, %v538
      %v551 = vadd.f32 %v333, %v445
      %v552 = vadd.f32 %v334, %v541
      %553 = vst [vmem:[#allocation2] sm:$0xff] %v543
      %vm554 = vcmask 556032
      %555 = vst.msk [vmem:[#allocation2 + $0x8] sm:$0xff] %vm554, %v544
      %556 = vst [vmem:[#allocation2 + $0x10] sm:$0xff] %v545
      %557 = vst.msk [vmem:[#allocation2 + $0x18] sm:$0xff] %vm554, %v546
      %558 = vst [vmem:[#allocation2 + $0x20] sm:$0xff] %v547
      %559 = vst.msk [vmem:[#allocation2 + $0x28] sm:$0xff] %vm554, %v548
      %560 = vst [vmem:[#allocation2 + $0x30] sm:$0xff] %v549
      %561 = vst.msk [vmem:[#allocation2 + $0x38] sm:$0xff] %vm554, %v550
      %562 = vst [vmem:[#allocation2 + $0x40] sm:$0xf] %v551
      %vm563 = vcmask 551936
      %564 = vst.msk [vmem:[#allocation2 + $0x48] sm:$0xf] %vm563, %v552
      %p565 = scmp.eq.s32.totalorder %s19, 2
      // Predicated region
      $region37: #{tpu_custom_call.1} parent=31 // pred_check
        %p566 = pneg %p565
      $region38: #{tpu_custom_call.1} parent=31 // pred_check_branch
        %568 = sbr.rel (%p566) target = $region40
      $region39: #{tpu_custom_call.1} parent=31 // pred_region
        %v569 = vld [vmem:[#allocation2] sm:$0xff]
        %v570 = vld [vmem:[#allocation2 + $0x8] sm:$0xff]
        %v571 = vld [vmem:[#allocation2 + $0x10] sm:$0xff]
        %v572 = vld [vmem:[#allocation2 + $0x18] sm:$0xff]
        %v573 = vld [vmem:[#allocation2 + $0x20] sm:$0xff]
        %v574 = vld [vmem:[#allocation2 + $0x28] sm:$0xff]
        %v575 = vld [vmem:[#allocation2 + $0x30] sm:$0xff]
        %v576 = vld [vmem:[#allocation2 + $0x38] sm:$0xff]
        %v577 = vld [vmem:[#allocation2 + $0x40] sm:$0xf]
        %v578 = vld [vmem:[#allocation2 + $0x48] sm:$0xf]
        %v579 = vsel %vm554, %v570, 0.0
        %v580 = vadd.f32 %v569, %v579
        %581 = vadd.xlane.f32.xlu0 %v580
        %v582 = vpop.xlane.xlu0 %581
        %v583 = vsel %vm554, %v572, 0.0
        %v584 = vadd.f32 %v571, %v583
        %585 = vadd.xlane.f32.xlu0 %v584
        %v586 = vpop.xlane.xlu0 %585
        %v587 = vsel %vm554, %v574, 0.0
        %v588 = vadd.f32 %v573, %v587
        %589 = vadd.xlane.f32.xlu0 %v588
        %v590 = vpop.xlane.xlu0 %589
        %v591 = vsel %vm554, %v576, 0.0
        %v592 = vadd.f32 %v575, %v591
        %593 = vadd.xlane.f32.xlu0 %v592
        %v594 = vpop.xlane.xlu0 %593
        %vm595 = vcmask 1043456
        %v596 = vsel %vm595, %v577, 0.0
        %v597 = vsel %vm563, %v578, 0.0
        %v598 = vadd.f32 %v596, %v597
        %599 = vadd.xlane.f32.xlu0 %v598
        %v600 = vpop.xlane.xlu0 %599
        %v601 = vmul.f32 %v582, 0.0051020407
        %v602 = vmul.f32 %v586, 0.0051020407
        %v603 = vmul.f32 %v590, 0.0051020407
        %v604 = vmul.f32 %v594, 0.0051020407
        %v605 = vmul.f32 %v600, 0.0051020407
        %v606 = vld [vmem:[%s2] sm:$0xff]
        %v607 = vld [vmem:[%s2 + $0x8] sm:$0xff]
        %v608 = vld [vmem:[%s2 + $0x10] sm:$0xff]
        %v609 = vld [vmem:[%s2 + $0x18] sm:$0xff]
        %v610 = vld [vmem:[%s2 + $0x20] sm:$0xf]
        %v611 = vadd.f32 %v601, %v606
        %v612 = vadd.f32 %v602, %v607
        %v613 = vadd.f32 %v603, %v608
        %v614 = vadd.f32 %v604, %v609
        %v615 = vadd.f32 %v605, %v610
        %vm616 = vcmask 7168
        %617 = vst.msk [vmem:[%s221] sm:$0xff] %vm616, %v611
        %618 = vst.msk [vmem:[%s221 + $0x8] sm:$0xff] %vm616, %v612
        %619 = vst.msk [vmem:[%s221 + $0x10] sm:$0xff] %vm616, %v613
        %620 = vst.msk [vmem:[%s221 + $0x18] sm:$0xff] %vm616, %v614
        %vm621 = vcmask 3072
        %622 = vst.msk [vmem:[%s221 + $0x20] sm:$0xf] %vm621, %v615
      $region40: #{tpu_custom_call.1} parent=31 // pred_fallthru
        _
      %p623 = scmp.lt.s32.totalorder %s18, 0
      %s624 = scalar_select %p623, %s18, 0
      %s625 = smul.addr %s624, 5
      %s626 = smul.addr %s625, 8
      %s627 = scalar_lea.vmem %s3, %s626
      // Predicated region
      $region41: #{tpu_custom_call.1} parent=31 // pred_check
        %p628 = pneg %p119
      $region42: #{tpu_custom_call.1} parent=31 // pred_check_branch
        %630 = sbr.rel (%p628) target = $region44
      $region43: #{tpu_custom_call.1} parent=31 // pred_region
        _
      $region44: #{tpu_custom_call.1} parent=31 // pred_fallthru
        _
      // Predicated region
      $region45: #{tpu_custom_call.1} parent=31 // pred_check
        %p631 = pneg %p119
      $region46: #{tpu_custom_call.1} parent=31 // pred_check_branch
        %633 = sbr.rel (%p631) target = $region48
      $region47: #{tpu_custom_call.1} parent=31 // pred_region
        %p634 = scmp.lt.s32.totalorder %s18, 0
        %s635 = scalar_select %p634, %s18, 0
        %s636 = smul.addr %s635, 5
        %s637 = smul.addr %s636, 8
        %s638 = scalar_lea.vmem %s3, %s637
      $region48: #{tpu_custom_call.1} parent=31 // pred_fallthru
        _
    $region32: #{tpu_custom_call.1} parent=5 // pred_fallthru
      _
    %p639 = scmp.le.s32.totalorder 2, %s9
    // Predicated region
    $region49: #{tpu_custom_call.1} parent=5 // pred_check
      %p640 = pneg %p639
    $region50: #{tpu_custom_call.1} parent=5 // pred_check_branch
      %642 = sbr.rel (%p640) target = $region52
    $region51: #{tpu_custom_call.1} parent=5 // pred_region
      %s643 = ssub.s32 %s9, 2
    $region52: #{tpu_custom_call.1} parent=5 // pred_fallthru
      _
  $region6: #{tpu_custom_call.1} parent=0 // loop_footer
    %s13 = sadd.s32 1, %s9
  $region7: #{tpu_custom_call.1} parent=0 // loop_footer_branch
    %8 = sbr.rel target = $region3
  $region8: #{tpu_custom_call.1} parent=0 // loop_exit
    _

</llo_original>
